<compile_context>
chip_gen: v7x
topology: tpu7x:2x2x1
jax: 0.10.0
libtpu: 0.0.40
codegen_flags: <defaults>
</compile_context>

<pallas_src>
import jax
import jax.numpy as jnp
import numpy as np
from jax.experimental import pallas as pl
from jax.experimental.pallas import tpu as pltpu


def build_pe(embedding_dim: int, max_length: int = 5000, dtype=jnp.float32) -> jnp.ndarray:
    """Fixed sinusoidal positional-encoding buffer (matches the PyTorch __init__).

    Returns (max_length, embedding_dim); the PyTorch module stores the
    equivalent (max_length, 1, embedding_dim) — the batch axis is broadcast
    inside the kernel instead of being materialized in HBM.
    """
    position = np.arange(0, max_length, dtype=np.float32)[:, None]               # (L, 1)
    div_term = np.exp(
        np.arange(0, embedding_dim, 2, dtype=np.float32)
        * (-np.log(10000.0) / embedding_dim)
    )                                                                             # (D/2,)
    pe = np.zeros((max_length, embedding_dim), dtype=np.float32)
    pe[:, 0::2] = np.sin(position * div_term)
    pe[:, 1::2] = np.cos(position * div_term)
    return jnp.asarray(pe, dtype=dtype)


def _pe_add_kernel(x_ref, pe_ref, o_ref):
    # x_ref: (tS, B, D) tile; pe_ref: (tS, D) tile; o_ref: (tS, B, D) tile.
    # Broadcasting pe over batch is an in-VMEM sublane broadcast (VPU), not an
    # HBM read.  The add promotes to the wider dtype (f32 pe buffer) and the
    # store casts to the output dtype — same promotion as the PyTorch add.
    o_ref[...] = (x_ref[...] + pe_ref[...][:, None, :]).astype(o_ref.dtype)


def _round_up(n: int, m: int) -> int:
    return ((n + m - 1) // m) * m


def _sublane_pack(dtype) -> int:
    # f32 -> 8, bf16 -> 16, int8/fp8 -> 32 rows per packed sublane tile.
    return max(8, 32 // jnp.dtype(dtype).itemsize)


def _vmem_capacity_bytes() -> int:
    try:
        info = pltpu.get_tpu_info()
        return int(getattr(info, "vmem_capacity_bytes", 64 << 20))
    except Exception:
        return 64 << 20  # conservative (v7x-sized) fallback


def _per_buffer_budget_bytes(vmem_cap: int) -> int:
    # v7x: 64 MiB VMEM per TensorCore -> cap per-buffer tiles at ~4 MiB.
    # v5e/v6e: 128 MiB physical -> ~6 MiB tiles sit near the measured
    # 85%-of-HBM-roofline regime for mem-bound streaming adds.
    return (4 << 20) if vmem_cap <= (64 << 20) else (6 << 20)


def _pick_tile_rows(S: int, padded_row_bytes: int, pack: int, budget_bytes: int) -> int:
    """Largest sublane-pack-aligned row tile whose padded buffer stays <= budget."""
    budget_rows = max(pack, budget_bytes // max(padded_row_bytes, 1))
    budget_rows = (budget_rows // pack) * pack
    if budget_rows >= S:
        # Whole array fits one block; still split into >=2 grid steps when S
        # permits so the pipeline has work to overlap and v7x's second
        # TensorCore is not left idle.
        if S >= 2 * pack:
            return _round_up(-(-S // 2), pack)
        return S
    return budget_rows


def fixed_positional_encoding(x: jnp.ndarray, pe: jnp.ndarray,
                              tile_rows: int | None = None,
                              donate_x: bool = False) -> jnp.ndarray:
    """Forward of FixedPositionalEncoding.

    x:  (S, B, D) sequence-first activations.
    pe: (max_length, D) fixed sinusoidal buffer (f32, from build_pe).
    """
    S, B, D = x.shape
    assert pe.ndim == 2 and pe.shape[1] == D, "pe must be (max_length, embedding_dim)"
    assert S <= pe.shape[0], f"sequence length {S} exceeds pe max_length {pe.shape[0]}"

    out_dtype = jnp.promote_types(x.dtype, pe.dtype)   # PyTorch: f32 buffer + x

    # --- generation-aware tile sizing (VMEM-padded accounting) -----------------
    vmem_cap = _vmem_capacity_bytes()
    budget = _per_buffer_budget_bytes(vmem_cap)

    pack_x = _sublane_pack(x.dtype)
    pack_o = _sublane_pack(out_dtype)
    pack = max(pack_x, pack_o)
    lane_D = _round_up(D, 128)
    row_bytes_x = _round_up(B, pack_x) * lane_D * jnp.dtype(x.dtype).itemsize
    row_bytes_o = _round_up(B, pack_o) * lane_D * jnp.dtype(out_dtype).itemsize
    row_bytes_pe = lane_D * jnp.dtype(pe.dtype).itemsize

    if tile_rows is None:
        tS = _pick_tile_rows(S, max(row_bytes_x, row_bytes_o), pack, budget)
    else:
        tS = max((min(tile_rows, S) // pack) * pack, min(S, pack))

    # Double-buffered x, out and (tiny) pe tiles, plus headroom for internal scratch.
    vmem_needed = 2 * tS * (row_bytes_x + row_bytes_o + row_bytes_pe)
    vmem_limit = int(min(max(vmem_needed + (8 << 20), 16 << 20), vmem_cap - (16 << 20)))

    n_blocks = pl.cdiv(S, tS)
    bytes_accessed = (S * B * D * (jnp.dtype(x.dtype).itemsize
                                   + jnp.dtype(out_dtype).itemsize)
                      + S * D * jnp.dtype(pe.dtype).itemsize)   # (2 + 1/B)·S·B·D·itemsize

    out = pl.pallas_call(
        _pe_add_kernel,
        out_shape=jax.ShapeDtypeStruct((S, B, D), out_dtype),
        grid=(n_blocks,),
        in_specs=[
            pl.BlockSpec((tS, B, D), lambda i: (i, 0, 0)),   # x tile
            pl.BlockSpec((tS, D), lambda i: (i, 0)),         # pe tile (not batch-tiled)
        ],
        out_specs=pl.BlockSpec((tS, B, D), lambda i: (i, 0, 0)),
        compiler_params=pltpu.CompilerParams(
            dimension_semantics=("parallel",),               # shard grid over v7x's 2 TCs
            vmem_limit_bytes=vmem_limit,
        ),
        cost_estimate=pl.CostEstimate(
            flops=S * B * D, transcendentals=0, bytes_accessed=int(bytes_accessed)),
        # Aliasing avoids a fresh HBM output allocation but only helps when the
        # caller actually donates x; otherwise XLA inserts a defensive copy.
        input_output_aliases=({0: 0} if (donate_x and out_dtype == x.dtype) else {}),
    )(x, pe)
    return out


if __name__ == "__main__":
    key = jax.random.PRNGKey(0)

    # --- Test 1: small shapes consistent with the module (seq=8, batch=2, D=32).
    S, B, D = 8, 2, 32
    pe = build_pe(D, max_length=64)                     # (64, 32) f32 fixed buffer
    x = jax.random.normal(key, (S, B, D), dtype=jnp.float32)

    out = jax.block_until_ready(fixed_positional_encoding(x, pe))
    ref = x + pe[:S][:, None, :]
    np.testing.assert_allclose(np.asarray(out), np.asarray(ref), rtol=1e-6, atol=1e-6)

    # --- Test 2: lane-dense last dim (D=128) with a multi-step pipelined grid.
    S2, B2, D2 = 64, 2, 128
    pe2 = build_pe(D2, max_length=128)
    x2 = jax.random.normal(jax.random.PRNGKey(1), (S2, B2, D2), dtype=jnp.float32)
    out2 = jax.block_until_ready(fixed_positional_encoding(x2, pe2, tile_rows=16))  # grid=(4,)
    ref2 = x2 + pe2[:S2][:, None, :]
    np.testing.assert_allclose(np.asarray(out2), np.asarray(ref2), rtol=1e-6, atol=1e-6)

    print("KERNEL_OK")
</pallas_src>

<mosaic_0001>
module attributes {stable_mosaic.version = 11 : i64} {
  func.func @_pe_add_kernel(%arg0: i32, %arg1: memref<8x2x32xf32, #tpu.memory_space<vmem>>, %arg2: memref<8x32xf32, #tpu.memory_space<vmem>>, %arg3: memref<8x2x32xf32, #tpu.memory_space<vmem>>) attributes {dimension_semantics = [#tpu.dimension_semantics<parallel>], iteration_bounds = array<i64: 1>, scalar_prefetch = 0 : i64, scratch_operands = 0 : i64, tpu.core_type = #tpu.core_type<tc>, window_params = [{transform_indices = @transform_0, window_bounds = array<i64: 8, 2, 32>}, {transform_indices = @transform_1, window_bounds = array<i64: 8, 32>}, {transform_indices = @transform_2, window_bounds = array<i64: 8, 2, 32>}]} {
    %c0 = arith.constant 0 : index
    %c0_0 = arith.constant 0 : index
    %c0_1 = arith.constant 0 : index
    %0 = vector.load %arg1[%c0, %c0_0, %c0_1] : memref<8x2x32xf32, #tpu.memory_space<vmem>>, vector<8x2x32xf32>
    %c0_2 = arith.constant 0 : index
    %c0_3 = arith.constant 0 : index
    %1 = vector.load %arg2[%c0_2, %c0_3] : memref<8x32xf32, #tpu.memory_space<vmem>>, vector<8x32xf32>
    %2 = vector.shape_cast %1 : vector<8x32xf32> to vector<8x1x32xf32>
    %3 = vector.broadcast %2 : vector<8x1x32xf32> to vector<8x2x32xf32>
    %4 = arith.addf %0, %3 : vector<8x2x32xf32>
    %c0_4 = arith.constant 0 : index
    %c0_5 = arith.constant 0 : index
    %c0_6 = arith.constant 0 : index
    %5 = vector.load %arg3[%c0_4, %c0_5, %c0_6] : memref<8x2x32xf32, #tpu.memory_space<vmem>>, vector<8x2x32xf32>
    tpu.vector_store %arg3[%c0_4, %c0_5, %c0_6], %4 {strides = array<i32>} : memref<8x2x32xf32, #tpu.memory_space<vmem>>, vector<8x2x32xf32>,
    return
  }
  func.func @transform_0(%arg0: i32) -> (i32, i32, i32) {
    %c0_i32 = arith.constant 0 : i32
    %c0_i32_0 = arith.constant 0 : i32
    %c0_i32_1 = arith.constant 0 : i32
    return %arg0, %c0_i32, %c0_i32_0 : i32, i32, i32
  }
  func.func @transform_1(%arg0: i32) -> (i32, i32) {
    %c0_i32 = arith.constant 0 : i32
    %c0_i32_0 = arith.constant 0 : i32
    return %arg0, %c0_i32 : i32, i32
  }
  func.func @transform_2(%arg0: i32) -> (i32, i32, i32) {
    %c0_i32 = arith.constant 0 : i32
    %c0_i32_0 = arith.constant 0 : i32
    %c0_i32_1 = arith.constant 0 : i32
    return %arg0, %c0_i32, %c0_i32_0 : i32, i32, i32
  }
}

</mosaic_0001>

<llo_original>
// kernel: tpu_custom_call.1
$region0: #{tpu_custom_call.1}
  #allocation0 [shape = 'u32[]', space=smem, size = 0x4, offset = 0x4, fixed_abs, tag = 'smem constant byte address 0x4 - core index']
  #allocation1 [shape = 'u32[144,128]{1,0:T(1,128)}', space=vmem, size = 0x12000, scoped, tag = 'internal scratch']
  %s0 = inlined_call_operand.vmem [shape: f32[8,2,32], index: 0, kind: input, shape index: {}]
  %s1 = inlined_call_operand.vmem [shape: f32[64,32], index: 1, kind: input, shape index: {}]
  %s2 = inlined_call_operand.hbm [shape: f32[8,2,32], index: 2, kind: output, shape index: {}]
  %s3 = sld [smem:[#allocation0]]
  $region18: #{tpu_custom_call.1} parent=0
    _
  %s5 = ssub.s32 1, %s3
  %s6 = scalar_select 0, %s5, %s3
  $region1: #{tpu_custom_call.1} parent=0
    #allocation2 [shape = 'u8[8192]{0}', space=vmem, size = 0x2000, scoped, tag = 'output window, operand 0, single buffered']
    #allocation3 [shape = 's32[1]{0}', space=sflag, size = 0x4, scoped, tag = 'scoped memory for tpu_custom_call.1']
    %7 = vsyncpa [#allocation3], 0
    // Predicated region
    $region2: #{tpu_custom_call.1} parent=1 // pred_check
      _
    $region3: #{tpu_custom_call.1} parent=1 // pred_check_branch
      %9 = sbr.rel (0) target = $region5
    $region4: #{tpu_custom_call.1} parent=1 // pred_region
      _
    $region5: #{tpu_custom_call.1} parent=1 // pred_fallthru
      _
    // Predicated region
    $region6: #{tpu_custom_call.1} parent=1 // pred_check
      _
    $region7: #{tpu_custom_call.1} parent=1 // pred_check_branch
      %11 = sbr.rel (0) target = $region9
    $region8: #{tpu_custom_call.1} parent=1 // pred_region
      _
    $region9: #{tpu_custom_call.1} parent=1 // pred_fallthru
      _
    %v12 = vld [vmem:[%s0] sm:$0x3]
    %v13 = vld [vmem:[%s0 + $0x2] sm:$0x3]
    %v14 = vld [vmem:[%s0 + $0x4] sm:$0x3]
    %v15 = vld [vmem:[%s0 + $0x6] sm:$0x3]
    %v16 = vld [vmem:[%s0 + $0x8] sm:$0x3]
    %v17 = vld [vmem:[%s0 + $0xa] sm:$0x3]
    %v18 = vld [vmem:[%s0 + $0xc] sm:$0x3]
    %v19 = vld [vmem:[%s0 + $0xe] sm:$0x3]
    %v20 = vld [vmem:[%s1] sm:$0xff]
    %v22 = vcombine.high %v20, %v20
    %v24 = vunpack.c.l.s4 1966171168
    %v25 = vunpack.c.0.s8 %v24
    %v26 = vlaneseq
    %v27 = vshrl.u32 %v26, 7
    %v28 = vsub.s32 %v25, %v27
    %v29 = vrot.slane %v20, %v28
    %v31 = vunpack.c.l.s4 1966171168
    %v32 = vunpack.c.0.s8 %v31
    %v33 = vlaneseq
    %v34 = vshrl.u32 %v33, 7
    %v35 = vsub.s32 %v32, %v34
    %v36 = vrot.slane %v22, %v35
    %v37 = vcombine.high %v29, %v29
    %v38 = vcombine.high %v36, %v36
    %v40 = vunpack.c.l.s4 1966171168
    %v41 = vunpack.c.0.s8 %v40
    %v42 = vlaneseq
    %v43 = vshrl.u32 %v42, 7
    %v44 = vsub.s32 %v41, %v43
    %v45 = vrot.slane %v29, %v44
    %v47 = vunpack.c.l.s4 1966171168
    %v48 = vunpack.c.0.s8 %v47
    %v49 = vlaneseq
    %v50 = vshrl.u32 %v49, 7
    %v51 = vsub.s32 %v48, %v50
    %v52 = vrot.slane %v36, %v51
    %v54 = vunpack.c.l.s4 1966171168
    %v55 = vunpack.c.0.s8 %v54
    %v56 = vlaneseq
    %v57 = vshrl.u32 %v56, 7
    %v58 = vsub.s32 %v55, %v57
    %v59 = vrot.slane %v37, %v58
    %v61 = vunpack.c.l.s4 1966171168
    %v62 = vunpack.c.0.s8 %v61
    %v63 = vlaneseq
    %v64 = vshrl.u32 %v63, 7
    %v65 = vsub.s32 %v62, %v64
    %v66 = vrot.slane %v38, %v65
    %v67 = vcombine.high %v45, %v45
    %v68 = vcombine.high %v52, %v52
    %v69 = vcombine.high %v59, %v59
    %v70 = vcombine.high %v66, %v66
    %v71 = vlaneseq
    %v72 = vshrl.u32 %v71, 7
    %v73 = vsub.s32 0, %v72
    %v74 = vrot.slane %v45, %v73
    %v75 = vlaneseq
    %v76 = vshrl.u32 %v75, 7
    %v77 = vsub.s32 0, %v76
    %v78 = vrot.slane %v59, %v77
    %v79 = vlaneseq
    %v80 = vshrl.u32 %v79, 7
    %v81 = vsub.s32 0, %v80
    %v82 = vrot.slane %v67, %v81
    %v83 = vlaneseq
    %v84 = vshrl.u32 %v83, 7
    %v85 = vsub.s32 0, %v84
    %v86 = vrot.slane %v69, %v85
    %v87 = vlaneseq
    %v88 = vshrl.u32 %v87, 7
    %v89 = vsub.s32 0, %v88
    %v90 = vrot.slane %v52, %v89
    %v91 = vlaneseq
    %v92 = vshrl.u32 %v91, 7
    %v93 = vsub.s32 0, %v92
    %v94 = vrot.slane %v66, %v93
    %v95 = vlaneseq
    %v96 = vshrl.u32 %v95, 7
    %v97 = vsub.s32 0, %v96
    %v98 = vrot.slane %v68, %v97
    %v99 = vlaneseq
    %v100 = vshrl.u32 %v99, 7
    %v101 = vsub.s32 0, %v100
    %v102 = vrot.slane %v70, %v101
    %v111 = vadd.f32 %v12, %v74
    %v112 = vadd.f32 %v13, %v78
    %v113 = vadd.f32 %v14, %v82
    %v114 = vadd.f32 %v15, %v86
    %v115 = vadd.f32 %v16, %v90
    %v116 = vadd.f32 %v17, %v94
    %v117 = vadd.f32 %v18, %v98
    %v118 = vadd.f32 %v19, %v102
    %vm119 = vcmask 254976
    %120 = vst.msk [vmem:[#allocation2] sm:$0x3] %vm119, %v111
    %121 = vst.msk [vmem:[#allocation2 + $0x2] sm:$0x3] %vm119, %v112
    %122 = vst.msk [vmem:[#allocation2 + $0x4] sm:$0x3] %vm119, %v113
    %123 = vst.msk [vmem:[#allocation2 + $0x6] sm:$0x3] %vm119, %v114
    %124 = vst.msk [vmem:[#allocation2 + $0x8] sm:$0x3] %vm119, %v115
    %125 = vst.msk [vmem:[#allocation2 + $0xa] sm:$0x3] %vm119, %v116
    %126 = vst.msk [vmem:[#allocation2 + $0xc] sm:$0x3] %vm119, %v117
    %127 = vst.msk [vmem:[#allocation2 + $0xe] sm:$0x3] %vm119, %v118
    // Predicated region
    $region10: #{tpu_custom_call.1} parent=1 // pred_check
      _
    $region11: #{tpu_custom_call.1} parent=1 // pred_check_branch
      %129 = sbr.rel (0) target = $region13
    $region12: #{tpu_custom_call.1} parent=1 // pred_region
      %s131 = ssub.s32 256, 256
      %132 = vsyncadd [#allocation3], %s131
      %s133 = sshll.u32 [#allocation2], 4
      %s134 = int_to_ptr.vmem [resolvable:$true] %s133
      %139 = dma.vmem_to_hbm [thread:$0]  %s134, 256, %s2, [#allocation3], 32, 32, 2
    $region13: #{tpu_custom_call.1} parent=1 // pred_fallthru
      _
    // Predicated region
    $region14: #{tpu_custom_call.1} parent=1 // pred_check
      _
    $region15: #{tpu_custom_call.1} parent=1 // pred_check_branch
      %141 = sbr.rel (0) target = $region17
    $region16: #{tpu_custom_call.1} parent=1 // pred_region
      %142 = dma.done [#allocation3], 256
    $region17: #{tpu_custom_call.1} parent=1 // pred_fallthru
      _
    %143 = vsyncpa [#allocation3], 1

</llo_original>
